<compile_context>
chip_gen: v5e
topology: v5e:2x2
jax: 0.10.0
libtpu: 0.0.40
codegen_flags: <defaults>
</compile_context>

<pallas_src>
import jax
import jax.numpy as jnp
from jax.experimental import pallas as pl
from jax.experimental.pallas import tpu as pltpu


def _make_gating_kernel(compute_dtype, num_experts):
    def gating_kernel(x_ref, w1_ref, shift_ref, w2_ref, b2_ref, o_ref):
        # ---- Linear1 (MXU). BN scale is folded into w1; x is cast to the MXU
        #      input dtype in-register (no padded bf16 copy of x in HBM).
        x = x_ref[...].astype(compute_dtype)
        h = jnp.dot(x, w1_ref[...], preferred_element_type=jnp.float32)
        # ---- folded BatchNorm shift (+ bias1) then ReLU (VPU, f32).
        h = jnp.maximum(h + shift_ref[...], 0.0)
        # Dropout(0.2): identity in eval mode; training-only logit noise skipped.
        # ---- Linear2 (MXU); 1/temperature folded into w2/b2.  Padded expert
        #      lanes carry a -1e30 bias so exp() underflows them to exactly 0.
        logits = jnp.dot(h, w2_ref[...], preferred_element_type=jnp.float32)
        logits = logits + b2_ref[...]
        # ---- softmax over the (128-lane padded) expert axis, f32 throughout.
        m = jnp.max(logits, axis=-1, keepdims=True)
        e = jnp.exp(logits - m)
        denom = jnp.sum(e, axis=-1, keepdims=True)
        r = pl.reciprocal(denom, approx=True)       # EUP, off the VALU
        r = r * (2.0 - denom * r)                   # one Newton step -> ~f32 exact
        probs = e * r                               # (TB, 128) f32
        # ---- lane-dense narrow store: transpose (XLU has slack) and keep only
        #      the real expert rows, so HBM sees (E, TB) instead of (TB, 128).
        probs_t = jnp.transpose(probs)              # (128, TB)
        o_ref[...] = probs_t[:num_experts, :].astype(o_ref.dtype)

    return gating_kernel


def gating_forward(x, params, temperature=1.0, *, block_batch=2048,
                   compute_dtype=jnp.bfloat16):
    """x: [B, feature_dim] float32 -> [B, num_experts] softmax gating weights."""
    w1, b1, gamma, beta, running_mean, running_var, w2, b2 = params
    eps = 1e-5
    inv_temp = 1.0 / float(temperature)

    # ---- one-time constant folds on the weights (per call, not per activation)
    bn_scale = gamma / jnp.sqrt(running_var + eps)                        # [H]
    w1f = (w1 * bn_scale[None, :]).astype(compute_dtype)                  # [D, H]
    shift = ((b1 - running_mean) * bn_scale + beta)[None, :]              # [1, H]
    shift = shift.astype(jnp.float32)
    w2f = (w2 * inv_temp).astype(jnp.float32)                             # [H, E]
    b2f = (b2 * inv_temp).astype(jnp.float32)                             # [E]

    B, D = x.shape
    H = w1.shape[1]
    E = w2.shape[1]

    # Expert axis padded to a full 128-lane vreg *inside VMEM only*; padded
    # lanes never reach HBM (the kernel stores just the first E rows).
    Ep = 128 * pl.cdiv(E, 128)
    w2p = jnp.zeros((H, Ep), jnp.float32).at[:, :E].set(w2f)
    b2p = jnp.full((1, Ep), -1e30, jnp.float32).at[0, :E].set(b2f)

    # ---- batch tiling / VMEM budget -------------------------------------------
    cbytes = jnp.dtype(compute_dtype).itemsize
    resident = D * H * cbytes + H * 4 + H * Ep * 4 + Ep * 4   # weights, one copy

    def footprint(tb):
        streams = tb * D * 4 + E * tb * 4          # x in / out, double-buffered
        live = tb * H * 4 + 3 * tb * Ep * 4        # h + softmax temps + transpose
        return 2 * (resident + streams) + live

    # 40 MiB working budget is safe under v7x's 64 MiB physical VMEM; v5e/v6e
    # (128 MiB) could go higher via a per-generation branch, but these shapes
    # never get close to the budget anyway.
    vmem_budget = 40 << 20
    if B <= 128:
        TB = B                                   # single block = whole batch
    else:
        cap = min(block_batch, B)
        # Ensure >= 2 grid steps when possible so v7x's 2nd TensorCore gets work.
        half = ((B + 1) // 2 + 127) // 128 * 128
        cap = min(cap, half)
        TB = 128
        for cand in (4096, 2048, 1024, 512, 256, 128):
            if cand <= cap and footprint(cand) <= vmem_budget:
                TB = cand
                break

    grid = (pl.cdiv(B, TB),)
    vmem_limit = int(min(max(2 * footprint(TB), 16 << 20), 48 << 20))

    kernel = _make_gating_kernel(compute_dtype, E)
    out_t = pl.pallas_call(
        kernel,
        out_shape=jax.ShapeDtypeStruct((E, B), jnp.float32),
        grid=grid,
        in_specs=[
            pl.BlockSpec((TB, D), lambda i: (i, 0)),     # activation stream (f32)
            pl.BlockSpec((D, H), lambda i: (0, 0)),      # w1 (BN-folded), resident
            pl.BlockSpec((1, H), lambda i: (0, 0)),      # BN shift, resident
            pl.BlockSpec((H, Ep), lambda i: (0, 0)),     # w2 (temp-folded), resident
            pl.BlockSpec((1, Ep), lambda i: (0, 0)),     # b2 (temp-folded + pad)
        ],
        out_specs=pl.BlockSpec((E, TB), lambda i: (0, i)),  # transposed, lane-dense
        compiler_params=pltpu.CompilerParams(
            dimension_semantics=("parallel",),
            vmem_limit_bytes=vmem_limit,
        ),
    )(x, w1f, shift, w2p, b2p)

    # Tiny (E, B) -> (B, E) flip; negligible next to the old padded f32 slab.
    return out_t.T


def init_params(key, feature_dim, num_experts):
    """Deterministic synthetic parameters matching the module's shapes."""
    hidden = feature_dim // 2
    k1, k2, k3, k4, k5 = jax.random.split(key, 5)
    # Linear1: torch weight [H, D] -> stored transposed as [D, H] here.
    w1 = (jax.random.normal(k1, (feature_dim, hidden), jnp.float32)
          * (1.0 / jnp.sqrt(feature_dim)))
    b1 = jax.random.normal(k2, (hidden,), jnp.float32) * 0.01
    # BatchNorm1d(hidden): affine params + running stats.
    gamma = jnp.ones((hidden,), jnp.float32)
    beta = jnp.zeros((hidden,), jnp.float32)
    running_mean = jax.random.normal(k3, (hidden,), jnp.float32) * 0.05
    running_var = jnp.ones((hidden,), jnp.float32) + 0.1 * jnp.abs(
        jax.random.normal(k4, (hidden,), jnp.float32))
    # Linear2: weight.normal_(0, 0.01), bias.fill_(0)  (as in module __init__).
    w2 = jax.random.normal(k5, (hidden, num_experts), jnp.float32) * 0.01
    b2 = jnp.zeros((num_experts,), jnp.float32)
    return (w1, b1, gamma, beta, running_mean, running_var, w2, b2)


def reference_forward(x, params, temperature=1.0):
    """Pure-JAX f32 reference of the eval-mode PyTorch forward."""
    w1, b1, gamma, beta, running_mean, running_var, w2, b2 = params
    eps = 1e-5
    z = x @ w1 + b1
    z = (z - running_mean) / jnp.sqrt(running_var + eps) * gamma + beta
    z = jnp.maximum(z, 0.0)
    logits = (z @ w2 + b2) / temperature
    return jax.nn.softmax(logits, axis=1)


if __name__ == "__main__":
    # Small shapes consistent with the module: feature_dim=32 -> hidden=16,
    # num_experts=3.
    batch, feature_dim, num_experts = 16, 32, 3
    temperature = 1.5

    key = jax.random.PRNGKey(0)
    kx, kp, kx2 = jax.random.split(key, 3)
    x = jax.random.normal(kx, (batch, feature_dim), jnp.float32)
    params = init_params(kp, feature_dim, num_experts)

    ref = reference_forward(x, params, temperature)

    # f32 compute path: tight match against the eval-mode PyTorch semantics.
    out_f32 = jax.block_until_ready(
        gating_forward(x, params, temperature, compute_dtype=jnp.float32))
    assert out_f32.shape == (batch, num_experts)
    assert jnp.allclose(jnp.sum(out_f32, axis=1), 1.0, atol=1e-5)
    assert jnp.allclose(out_f32, ref, atol=2e-5, rtol=1e-4)

    # Default bf16-MXU path: looser tolerance for bf16 rounding of x / folded w1.
    out_bf16 = jax.block_until_ready(gating_forward(x, params, temperature))
    assert out_bf16.shape == (batch, num_experts)
    assert jnp.allclose(jnp.sum(out_bf16, axis=1), 1.0, atol=1e-4)
    assert jnp.allclose(out_bf16, ref, atol=2e-3, rtol=2e-3)

    # Multi-step batch grid + ragged last block (no host-side padding of x).
    batch2 = 300
    x2 = jax.random.normal(kx2, (batch2, feature_dim), jnp.float32)
    ref2 = reference_forward(x2, params, temperature)
    out2 = jax.block_until_ready(gating_forward(x2, params, temperature))
    assert out2.shape == (batch2, num_experts)
    assert jnp.allclose(jnp.sum(out2, axis=1), 1.0, atol=1e-4)
    assert jnp.allclose(out2, ref2, atol=2e-3, rtol=2e-3)

    print("KERNEL_OK")
</pallas_src>

<mosaic_0001>
module attributes {stable_mosaic.version = 11 : i64} {
  func.func @gating_kernel(%arg0: i32, %arg1: memref<16x32xf32, #tpu.memory_space<vmem>>, %arg2: memref<32x16xf32, #tpu.memory_space<vmem>>, %arg3: memref<1x16xf32, #tpu.memory_space<vmem>>, %arg4: memref<16x128xf32, #tpu.memory_space<vmem>>, %arg5: memref<1x128xf32, #tpu.memory_space<vmem>>, %arg6: memref<3x16xf32, #tpu.memory_space<vmem>>) attributes {dimension_semantics = [#tpu.dimension_semantics<parallel>], iteration_bounds = array<i64: 1>, scalar_prefetch = 0 : i64, scratch_operands = 0 : i64, tpu.core_type = #tpu.core_type<tc>, window_params = [{transform_indices = @transform_0, window_bounds = array<i64: 16, 32>}, {pipeline_mode = #tpu.pipeline_mode<synchronous>, transform_indices = @transform_1, window_bounds = array<i64: 32, 16>}, {pipeline_mode = #tpu.pipeline_mode<synchronous>, transform_indices = @transform_2, window_bounds = array<i64: 1, 16>}, {pipeline_mode = #tpu.pipeline_mode<synchronous>, transform_indices = @transform_3, window_bounds = array<i64: 16, 128>}, {pipeline_mode = #tpu.pipeline_mode<synchronous>, transform_indices = @transform_4, window_bounds = array<i64: 1, 128>}, {transform_indices = @transform_5, window_bounds = array<i64: 3, 16>}]} {
    %c0 = arith.constant 0 : index
    %c0_0 = arith.constant 0 : index
    %0 = vector.load %arg1[%c0, %c0_0] : memref<16x32xf32, #tpu.memory_space<vmem>>, vector<16x32xf32>
    %c0_1 = arith.constant 0 : index
    %c0_2 = arith.constant 0 : index
    %1 = vector.load %arg2[%c0_1, %c0_2] : memref<32x16xf32, #tpu.memory_space<vmem>>, vector<32x16xf32>
    %cst = arith.constant dense<0.000000e+00> : vector<16x16xf32>
    %2 = tpu.matmul %0, %1, %cst {dimension_numbers = #tpu.dot_dimension_numbers<[1], [0], [0], [1], [0, 0, 1, 1], [], []>} : vector<16x32xf32>, vector<32x16xf32>, vector<16x16xf32> -> vector<16x16xf32>
    %c0_3 = arith.constant 0 : index
    %c0_4 = arith.constant 0 : index
    %3 = vector.load %arg3[%c0_3, %c0_4] : memref<1x16xf32, #tpu.memory_space<vmem>>, vector<1x16xf32>
    %4 = vector.broadcast %3 : vector<1x16xf32> to vector<16x16xf32>
    %5 = arith.addf %2, %4 : vector<16x16xf32>
    %cst_5 = arith.constant 0.000000e+00 : f32
    %6 = vector.broadcast %cst_5 : f32 to vector<16x16xf32>
    %7 = arith.maximumf %5, %6 : vector<16x16xf32>
    %c0_6 = arith.constant 0 : index
    %c0_7 = arith.constant 0 : index
    %8 = vector.load %arg4[%c0_6, %c0_7] : memref<16x128xf32, #tpu.memory_space<vmem>>, vector<16x128xf32>
    %cst_8 = arith.constant dense<0.000000e+00> : vector<16x128xf32>
    %9 = tpu.matmul %7, %8, %cst_8 {dimension_numbers = #tpu.dot_dimension_numbers<[1], [0], [0], [1], [0, 0, 1, 1], [], []>} : vector<16x16xf32>, vector<16x128xf32>, vector<16x128xf32> -> vector<16x128xf32>
    %c0_9 = arith.constant 0 : index
    %c0_10 = arith.constant 0 : index
    %10 = vector.load %arg5[%c0_9, %c0_10] : memref<1x128xf32, #tpu.memory_space<vmem>>, vector<1x128xf32>
    %11 = vector.broadcast %10 : vector<1x128xf32> to vector<16x128xf32>
    %12 = arith.addf %9, %11 : vector<16x128xf32>
    %cst_11 = arith.constant dense<0xFF800000> : vector<16xf32>
    %13 = vector.multi_reduction <maximumf>, %12, %cst_11 [1] : vector<16x128xf32> to vector<16xf32>
    %14 = vector.shape_cast %13 : vector<16xf32> to vector<16x1xf32>
    %15 = vector.broadcast %14 : vector<16x1xf32> to vector<16x128xf32>
    %16 = arith.subf %12, %15 : vector<16x128xf32>
    %17 = math.exp %16 : vector<16x128xf32>
    %cst_12 = arith.constant dense<0.000000e+00> : vector<16xf32>
    %18 = vector.multi_reduction <add>, %17, %cst_12 [1] : vector<16x128xf32> to vector<16xf32>
    %19 = vector.shape_cast %18 : vector<16xf32> to vector<16x1xf32>
    %20 = tpu.reciprocal %19 {approx = true} : vector<16x1xf32> -> vector<16x1xf32>
    %21 = arith.mulf %19, %20 : vector<16x1xf32>
    %cst_13 = arith.constant 2.000000e+00 : f32
    %22 = vector.broadcast %cst_13 : f32 to vector<16x1xf32>
    %23 = arith.subf %22, %21 : vector<16x1xf32>
    %24 = arith.mulf %20, %23 : vector<16x1xf32>
    %25 = vector.broadcast %24 : vector<16x1xf32> to vector<16x128xf32>
    %26 = arith.mulf %17, %25 : vector<16x128xf32>
    %27 = tpu.transpose %26, [1, 0] : vector<16x128xf32> -> vector<128x16xf32>
    %28 = vector.extract_strided_slice %27 {offsets = [0, 0], sizes = [3, 16], strides = [1, 1]} : vector<128x16xf32> to vector<3x16xf32>
    %c0_14 = arith.constant 0 : index
    %c0_15 = arith.constant 0 : index
    %29 = vector.load %arg6[%c0_14, %c0_15] : memref<3x16xf32, #tpu.memory_space<vmem>>, vector<3x16xf32>
    tpu.vector_store %arg6[%c0_14, %c0_15], %28 {strides = array<i32>} : memref<3x16xf32, #tpu.memory_space<vmem>>, vector<3x16xf32>,
    return
  }
  func.func @transform_0(%arg0: i32) -> (i32, i32) {
    %c0_i32 = arith.constant 0 : i32
    %c0_i32_0 = arith.constant 0 : i32
    return %arg0, %c0_i32 : i32, i32
  }
  func.func @transform_1(%arg0: i32) -> (i32, i32) {
    %c0_i32 = arith.constant 0 : i32
    %c0_i32_0 = arith.constant 0 : i32
    %c0_i32_1 = arith.constant 0 : i32
    return %c0_i32, %c0_i32_0 : i32, i32
  }
  func.func @transform_2(%arg0: i32) -> (i32, i32) {
    %c0_i32 = arith.constant 0 : i32
    %c0_i32_0 = arith.constant 0 : i32
    %c0_i32_1 = arith.constant 0 : i32
    return %c0_i32, %c0_i32_0 : i32, i32
  }
  func.func @transform_3(%arg0: i32) -> (i32, i32) {
    %c0_i32 = arith.constant 0 : i32
    %c0_i32_0 = arith.constant 0 : i32
    %c0_i32_1 = arith.constant 0 : i32
    return %c0_i32, %c0_i32_0 : i32, i32
  }
  func.func @transform_4(%arg0: i32) -> (i32, i32) {
    %c0_i32 = arith.constant 0 : i32
    %c0_i32_0 = arith.constant 0 : i32
    %c0_i32_1 = arith.constant 0 : i32
    return %c0_i32, %c0_i32_0 : i32, i32
  }
  func.func @transform_5(%arg0: i32) -> (i32, i32) {
    %c0_i32 = arith.constant 0 : i32
    %c0_i32_0 = arith.constant 0 : i32
    return %c0_i32, %arg0 : i32, i32
  }
}

</mosaic_0001>

<llo_original>
// kernel: tpu_custom_call.1
$region0: #{tpu_custom_call.1}
  #allocation0 [shape = 'u32[]', space=smem, size = 0x4, offset = 0x4, fixed_abs, tag = 'smem constant byte address 0x4 - core index']
  #allocation1 [shape = 'u32[72,128]{1,0:T(1,128)}', space=vmem, size = 0x9000, scoped, tag = 'internal scratch']
  %s0 = inlined_call_operand.vmem [shape: f32[16,32], index: 0, kind: input, shape index: {}]
  %s1 = inlined_call_operand.vmem [shape: f32[32,16], index: 1, kind: input, shape index: {}]
  %s2 = inlined_call_operand.vmem [shape: f32[1,16], index: 2, kind: input, shape index: {}]
  %s3 = inlined_call_operand.vmem [shape: f32[16,128], index: 3, kind: input, shape index: {}]
  %s4 = inlined_call_operand.vmem [shape: f32[1,128], index: 4, kind: input, shape index: {}]
  %s5 = inlined_call_operand.hbm [shape: f32[3,16], index: 5, kind: output, shape index: {}]
  %s6 = sld [smem:[#allocation0]]
  $region30: #{tpu_custom_call.1} parent=0
    _
  %s8 = ssub.s32 1, %s6
  %s9 = scalar_select 0, %s8, %s6
  $region1: #{tpu_custom_call.1} parent=0
    #allocation2 [shape = 'u8[2048]{0}', space=vmem, size = 0x800, scoped, tag = 'output window, operand 0, single buffered']
    #allocation3 [shape = 's32[1]{0}', space=sflag, size = 0x4, scoped, tag = 'scoped memory for tpu_custom_call.1']
    %10 = vsyncpa [#allocation3], 0
    // Predicated region
    $region2: #{tpu_custom_call.1} parent=1 // pred_check
      _
    $region3: #{tpu_custom_call.1} parent=1 // pred_check_branch
      %12 = sbr.rel (0) target = $region5
    $region4: #{tpu_custom_call.1} parent=1 // pred_region
      _
    $region5: #{tpu_custom_call.1} parent=1 // pred_fallthru
      _
    // Predicated region
    $region6: #{tpu_custom_call.1} parent=1 // pred_check
      _
    $region7: #{tpu_custom_call.1} parent=1 // pred_check_branch
      %14 = sbr.rel (0) target = $region9
    $region8: #{tpu_custom_call.1} parent=1 // pred_region
      _
    $region9: #{tpu_custom_call.1} parent=1 // pred_fallthru
      _
    // Predicated region
    $region10: #{tpu_custom_call.1} parent=1 // pred_check
      _
    $region11: #{tpu_custom_call.1} parent=1 // pred_check_branch
      %16 = sbr.rel (0) target = $region13
    $region12: #{tpu_custom_call.1} parent=1 // pred_region
      _
    $region13: #{tpu_custom_call.1} parent=1 // pred_fallthru
      _
    // Predicated region
    $region14: #{tpu_custom_call.1} parent=1 // pred_check
      _
    $region15: #{tpu_custom_call.1} parent=1 // pred_check_branch
      %18 = sbr.rel (0) target = $region17
    $region16: #{tpu_custom_call.1} parent=1 // pred_region
      _
    $region17: #{tpu_custom_call.1} parent=1 // pred_fallthru
      _
    // Predicated region
    $region18: #{tpu_custom_call.1} parent=1 // pred_check
      _
    $region19: #{tpu_custom_call.1} parent=1 // pred_check_branch
      %20 = sbr.rel (0) target = $region21
    $region20: #{tpu_custom_call.1} parent=1 // pred_region
      _
    $region21: #{tpu_custom_call.1} parent=1 // pred_fallthru
      _
    %v21 = vld [vmem:[%s0] sm:$0xff]
    %v22 = vld [vmem:[%s0 + $0x8] sm:$0xff]
    %v23 = vld [vmem:[%s1] sm:$0xff]
    %v24 = vld [vmem:[%s1 + $0x8] sm:$0xff]
    %v25 = vld [vmem:[%s1 + $0x10] sm:$0xff]
    %v26 = vld [vmem:[%s1 + $0x18] sm:$0xff]
    %v27 = vld [vmem:[%s2] sm:$0x1]
    %v29 = vperm.slane %v27, 0
    %vm31 = vcmask 261120
    %v33 = vsel %vm31, %v21, 0
    %v36 = vsel %vm31, %v22, 0
    %38 = vmatpush.msra.mxu0 0.0
    %39 = vmatpush.msra.mxu0 0.0
    %40 = vmatpush.msra.mxu0 0.0
    %41 = vmatpush.msra.mxu0 0.0
    %42 = vmatpush.msra.mxu0 0.0
    %43 = vmatpush.msra.mxu0 0.0
    %44 = vmatpush.msra.mxu0 0.0
    %45 = vmatpush.msra.mxu0 0.0
    %46 = vmatpush.msra.mxu0 0.0
    %47 = vmatpush.msra.mxu0 0.0
    %48 = vmatpush.msra.mxu0 0.0
    %49 = vmatpush.msra.mxu0 0.0
    %50 = vmatpush.msra.mxu0 %v26
    %51 = vmatpush.msra.mxu0 %v25
    %52 = vmatpush.msra.mxu0 %v24
    %53 = vmatpush.msra.mxu0 %v23
    %54 = vmatmul.f32.gmra.mxu0 %v33
    %v55 = vpop.f32.mrf.mxu0
    %v56 = vadd.f32 %v29, %v55
    %57 = vmatmul.f32.gmra.mxu0 %v36
    %v58 = vpop.f32.mrf.mxu0
    %v59 = vadd.f32 %v29, %v58
    %60 = vdwg.mxu0
    %v61 = vmax.f32 %v56, 0.0
    %v62 = vmax.f32 %v59, 0.0
    %v63 = vld [vmem:[%s3] sm:$0xff]
    %v64 = vld [vmem:[%s3 + $0x8] sm:$0xff]
    %v65 = vld [vmem:[%s4] sm:$0x1]
    %v67 = vperm.slane %v65, 0
    %vm69 = vcmask 130048
    %v71 = vsel %vm69, %v61, 0
    %v74 = vsel %vm69, %v62, 0
    %76 = vmatpush.msra.mxu0 0.0
    %77 = vmatpush.msra.mxu0 0.0
    %78 = vmatpush.msra.mxu0 0.0
    %79 = vmatpush.msra.mxu0 0.0
    %80 = vmatpush.msra.mxu0 0.0
    %81 = vmatpush.msra.mxu0 0.0
    %82 = vmatpush.msra.mxu0 0.0
    %83 = vmatpush.msra.mxu0 0.0
    %84 = vmatpush.msra.mxu0 0.0
    %85 = vmatpush.msra.mxu0 0.0
    %86 = vmatpush.msra.mxu0 0.0
    %87 = vmatpush.msra.mxu0 0.0
    %88 = vmatpush.msra.mxu0 0.0
    %89 = vmatpush.msra.mxu0 0.0
    %90 = vmatpush.msra.mxu0 %v64
    %91 = vmatpush.msra.mxu0 %v63
    %92 = vmatmul.f32.gmra.mxu0 %v71
    %v93 = vpop.f32.mrf.mxu0
    %v94 = vadd.f32 %v67, %v93
    %95 = vmatmul.f32.gmra.mxu0 %v74
    %v96 = vpop.f32.mrf.mxu0
    %v97 = vadd.f32 %v67, %v96
    %98 = vdwg.mxu0
    %99 = vmax.xlane.f32.xlu0 %v94
    %v100 = vpop.xlane.xlu0 %99
    %101 = vmax.xlane.f32.xlu0 %v97
    %v102 = vpop.xlane.xlu0 %101
    %v103 = vsub.f32 %v94, %v100
    %v104 = vsub.f32 %v97, %v102
    %v105 = vmul.f32 %v103, 1.442695
    %v106 = vpow.pop %v105
    %v107 = vmul.f32 %v104, 1.442695
    %v108 = vpow.pop %v107
    %109 = vadd.xlane.f32.xlu0 %v106
    %v110 = vpop.xlane.xlu0 %109
    %111 = vadd.xlane.f32.xlu0 %v108
    %v112 = vpop.xlane.xlu0 %111
    %v113 = vrcp.pop %v110
    %v114 = vrcp.pop %v112
    %v115 = vmul.f32 %v110, %v113
    %v116 = vmul.f32 %v112, %v114
    %v117 = vsub.f32 2.0, %v115
    %v118 = vsub.f32 2.0, %v116
    %v119 = vmul.f32 %v113, %v117
    %v120 = vmul.f32 %v114, %v118
    %v121 = vmul.f32 %v106, %v119
    %v122 = vmul.f32 %v108, %v120
    %123 = vxpose.xlu0.b32.start [1/16] %v121, 128
    %124 = vxpose.xlu0.b32.cont [2/16] %v122, 128
    %125 = vxpose.xlu0.b32.cont [3/16] 0.0, 128
    %126 = vxpose.xlu0.b32.cont [4/16] 0.0, 128
    %127 = vxpose.xlu0.b32.cont [5/16] 0.0, 128
    %128 = vxpose.xlu0.b32.cont [6/16] 0.0, 128
    %129 = vxpose.xlu0.b32.cont [7/16] 0.0, 128
    %130 = vxpose.xlu0.b32.cont [8/16] 0.0, 128
    %131 = vxpose.xlu0.b32.cont [9/16] 0.0, 128
    %132 = vxpose.xlu0.b32.cont [10/16] 0.0, 128
    %133 = vxpose.xlu0.b32.cont [11/16] 0.0, 128
    %134 = vxpose.xlu0.b32.cont [12/16] 0.0, 128
    %135 = vxpose.xlu0.b32.cont [13/16] 0.0, 128
    %136 = vxpose.xlu0.b32.cont [14/16] 0.0, 128
    %137 = vxpose.xlu0.b32.cont [15/16] 0.0, 128
    %138 = vxpose.xlu0.b32.end [16/16] 0.0, 128
    %v139 = vpop.trf.xlu0
    %v140 = vpop.trf.xlu0
    %v141 = vpop.trf.xlu0
    %v142 = vpop.trf.xlu0
    %v143 = vpop.trf.xlu0
    %v144 = vpop.trf.xlu0
    %v145 = vpop.trf.xlu0
    %v146 = vpop.trf.xlu0
    %v147 = vpop.trf.xlu0
    %v148 = vpop.trf.xlu0
    %v149 = vpop.trf.xlu0
    %v150 = vpop.trf.xlu0
    %v151 = vpop.trf.xlu0
    %v152 = vpop.trf.xlu0
    %v153 = vpop.trf.xlu0
    %v154 = vpop.trf.xlu0
    %vm155 = vcmask 124928
    %156 = vst.msk [vmem:[#allocation2] sm:$0x7] %vm155, %v139
    // Predicated region
    $region22: #{tpu_custom_call.1} parent=1 // pred_check
      _
    $region23: #{tpu_custom_call.1} parent=1 // pred_check_branch
      %158 = sbr.rel (0) target = $region25
    $region24: #{tpu_custom_call.1} parent=1 // pred_region
      %160 = vsyncadd [#allocation3], 0
      %s162 = sshll.u32 [#allocation2], 4
      %s163 = int_to_ptr.vmem [resolvable:$true] %s162
      %s164 = sshll.u32 %s5, 4
      %s165 = int_to_ptr.hbm [resolvable:$true] %s164
      %167 = dma.vmem_to_hbm [thread:$0]  %s163, 64, %s165, [#allocation3]
    $region25: #{tpu_custom_call.1} parent=1 // pred_fallthru
      _
    // Predicated region
    $region26: #{tpu_custom_call.1} parent=1 // pred_check
      _
    $region27: #{tpu_custom_call.1} parent=1 // pred_check_branch
      %169 = sbr.rel (0) target = $region29
    $region28: #{tpu_custom_call.1} parent=1 // pred_region
      %171 = dma.done [#allocation3], 64
    $region29: #{tpu_custom_call.1} parent=1 // pred_fallthru
      _
    %172 = vsyncpa [#allocation3], 1

</llo_original>
